<compile_context>
chip_gen: v5e
topology: v5e:2x2
jax: 0.10.0
libtpu: 0.0.40
codegen_flags: <defaults>
</compile_context>

<pallas_src>
import jax
import jax.numpy as jnp
from jax.experimental import pallas as pl
from jax.experimental.pallas import tpu as pltpu

HIDDEN = 128
SUBLANE = 8
DEFAULT_TB = 2048  # batch tile cap (rows); ~5-6 MiB of VMEM at f32


def _round_up(x, m):
    return ((x + m - 1) // m) * m


def _cdiv(a, b):
    return (a + b - 1) // b


def actor_kernel(state_ref, w1_ref, b1_ref, w2_ref, b2_ref, wo_ref, bo_ref,
                 out_ref):
    x = state_ref[...]
    w2 = w2_ref[...]
    b2 = b2_ref[...]

    # hidden1 + ReLU
    h = jnp.dot(x, w1_ref[...], preferred_element_type=jnp.float32) + b1_ref[...]
    h = jnp.maximum(h, 0.0)

    def lin2(v):
        return jnp.dot(v, w2, preferred_element_type=jnp.float32) + b2

    # hidden2 applied 5 times with the exact activation sequence of forward()
    h = jnp.tanh(lin2(h))
    h = jnp.maximum(lin2(h), 0.0)
    h = jnp.maximum(lin2(h), 0.0)
    h = jnp.tanh(lin2(h))
    h = jnp.tanh(lin2(h))

    # output layer + sigmoid (out_dim is tiny -> negligible EUP/store cost)
    logits = jnp.dot(h, wo_ref[...], preferred_element_type=jnp.float32) + bo_ref[...]
    out_ref[...] = jax.nn.sigmoid(logits)


def actor_forward(state, w1, b1, w2, b2, wo, bo, *, tb=DEFAULT_TB):
    batch, in_dim = state.shape
    out_dim = wo.shape[1]
    f32 = jnp.float32

    # Balanced batch tiling: near-equal tiles, multiple of 8 rows.
    tb_cap = max(SUBLANE, _round_up(tb, SUBLANE))
    num_tiles = max(1, _cdiv(batch, tb_cap))
    # Ensure >=2 grid steps (when the batch is not tiny) so the "parallel"
    # batch axis can be sharded across both TensorCores on v7x.
    if num_tiles == 1 and batch >= 2 * SUBLANE:
        num_tiles = 2
    tb_eff = _round_up(_cdiv(batch, num_tiles), SUBLANE)
    batch_pad = _round_up(batch, tb_eff)
    grid = (batch_pad // tb_eff,)

    state_f = state.astype(f32)
    if batch_pad != batch:
        state_p = jnp.zeros((batch_pad, in_dim), f32).at[:batch].set(state_f)
    else:
        state_p = state_f

    out = pl.pallas_call(
        actor_kernel,
        out_shape=jax.ShapeDtypeStruct((batch_pad, out_dim), f32),
        grid=grid,
        in_specs=[
            pl.BlockSpec((tb_eff, in_dim), lambda i: (i, 0)),    # state (tiled)
            pl.BlockSpec((in_dim, HIDDEN), lambda i: (0, 0)),    # w1 (resident)
            pl.BlockSpec((1, HIDDEN), lambda i: (0, 0)),         # b1
            pl.BlockSpec((HIDDEN, HIDDEN), lambda i: (0, 0)),    # w2
            pl.BlockSpec((1, HIDDEN), lambda i: (0, 0)),         # b2
            pl.BlockSpec((HIDDEN, out_dim), lambda i: (0, 0)),   # wo
            pl.BlockSpec((1, out_dim), lambda i: (0, 0)),        # bo
        ],
        out_specs=pl.BlockSpec((tb_eff, out_dim), lambda i: (i, 0)),
        compiler_params=pltpu.CompilerParams(
            dimension_semantics=("parallel",),
            vmem_limit_bytes=32 * 1024 * 1024),
    )(state_p, w1.astype(f32), b1.astype(f32), w2.astype(f32),
      b2.astype(f32), wo.astype(f32), bo.astype(f32))

    return out[:batch] if batch_pad != batch else out


def init_params(key, in_dim, out_dim, init_w=0.003):
    """Deterministic synthetic init mirroring nn.Linear shapes.

    Weights are stored transposed: (in_features, out_features)."""
    k1, k2, k3, k4, k5, k6 = jax.random.split(key, 6)
    bound1 = 1.0 / jnp.sqrt(in_dim)
    bound2 = 1.0 / jnp.sqrt(HIDDEN)
    w1 = jax.random.uniform(k1, (in_dim, HIDDEN), jnp.float32, -bound1, bound1)
    b1 = jax.random.uniform(k2, (1, HIDDEN), jnp.float32, -bound1, bound1)
    w2 = jax.random.uniform(k3, (HIDDEN, HIDDEN), jnp.float32, -bound2, bound2)
    b2 = jax.random.uniform(k4, (1, HIDDEN), jnp.float32, -bound2, bound2)
    wo = jax.random.uniform(k5, (HIDDEN, out_dim), jnp.float32, -init_w, init_w)
    bo = jax.random.uniform(k6, (1, out_dim), jnp.float32, -init_w, init_w)
    return w1, b1, w2, b2, wo, bo


def actor_ref(state, w1, b1, w2, b2, wo, bo):
    """Pure-JAX reference for correctness checking."""
    h = jax.nn.relu(state @ w1 + b1)
    h = jnp.tanh(h @ w2 + b2)
    h = jax.nn.relu(h @ w2 + b2)
    h = jax.nn.relu(h @ w2 + b2)
    h = jnp.tanh(h @ w2 + b2)
    h = jnp.tanh(h @ w2 + b2)
    return jax.nn.sigmoid(h @ wo + bo)


if __name__ == "__main__":
    key = jax.random.PRNGKey(0)
    k_state, k_params, k_big = jax.random.split(key, 3)

    batch, in_dim, out_dim = 8, 4, 2
    state = jax.random.normal(k_state, (batch, in_dim), jnp.float32)
    params = init_params(k_params, in_dim, out_dim)

    # Small-batch case (single grid step).
    action = actor_forward(state, *params)
    action = jax.block_until_ready(action)
    expected = actor_ref(state, *params)
    assert action.shape == (batch, out_dim)
    assert jnp.allclose(action, expected, atol=1e-5, rtol=1e-5)

    # Larger batch exercising the balanced multi-tile grid (+ remainder pad).
    big_batch = 300
    big_state = jax.random.normal(k_big, (big_batch, in_dim), jnp.float32)
    big_action = jax.block_until_ready(actor_forward(big_state, *params))
    big_expected = actor_ref(big_state, *params)
    assert big_action.shape == (big_batch, out_dim)
    assert jnp.allclose(big_action, big_expected, atol=1e-5, rtol=1e-5)

    print("KERNEL_OK")
</pallas_src>

<mosaic_0001>
module attributes {stable_mosaic.version = 11 : i64} {
  func.func @actor_kernel(%arg0: i32, %arg1: memref<8x4xf32, #tpu.memory_space<vmem>>, %arg2: memref<4x128xf32, #tpu.memory_space<vmem>>, %arg3: memref<1x128xf32, #tpu.memory_space<vmem>>, %arg4: memref<128x128xf32, #tpu.memory_space<vmem>>, %arg5: memref<1x128xf32, #tpu.memory_space<vmem>>, %arg6: memref<128x2xf32, #tpu.memory_space<vmem>>, %arg7: memref<1x2xf32, #tpu.memory_space<vmem>>, %arg8: memref<8x2xf32, #tpu.memory_space<vmem>>) attributes {dimension_semantics = [#tpu.dimension_semantics<parallel>], iteration_bounds = array<i64: 1>, scalar_prefetch = 0 : i64, scratch_operands = 0 : i64, tpu.core_type = #tpu.core_type<tc>, window_params = [{transform_indices = @transform_0, window_bounds = array<i64: 8, 4>}, {pipeline_mode = #tpu.pipeline_mode<synchronous>, transform_indices = @transform_1, window_bounds = array<i64: 4, 128>}, {pipeline_mode = #tpu.pipeline_mode<synchronous>, transform_indices = @transform_2, window_bounds = array<i64: 1, 128>}, {pipeline_mode = #tpu.pipeline_mode<synchronous>, transform_indices = @transform_3, window_bounds = array<i64: 128, 128>}, {pipeline_mode = #tpu.pipeline_mode<synchronous>, transform_indices = @transform_4, window_bounds = array<i64: 1, 128>}, {pipeline_mode = #tpu.pipeline_mode<synchronous>, transform_indices = @transform_5, window_bounds = array<i64: 128, 2>}, {pipeline_mode = #tpu.pipeline_mode<synchronous>, transform_indices = @transform_6, window_bounds = array<i64: 1, 2>}, {transform_indices = @transform_7, window_bounds = array<i64: 8, 2>}]} {
    %c0 = arith.constant 0 : index
    %c0_0 = arith.constant 0 : index
    %0 = vector.load %arg1[%c0, %c0_0] : memref<8x4xf32, #tpu.memory_space<vmem>>, vector<8x4xf32>
    %c0_1 = arith.constant 0 : index
    %c0_2 = arith.constant 0 : index
    %1 = vector.load %arg4[%c0_1, %c0_2] : memref<128x128xf32, #tpu.memory_space<vmem>>, vector<128x128xf32>
    %c0_3 = arith.constant 0 : index
    %c0_4 = arith.constant 0 : index
    %2 = vector.load %arg5[%c0_3, %c0_4] : memref<1x128xf32, #tpu.memory_space<vmem>>, vector<1x128xf32>
    %c0_5 = arith.constant 0 : index
    %c0_6 = arith.constant 0 : index
    %3 = vector.load %arg2[%c0_5, %c0_6] : memref<4x128xf32, #tpu.memory_space<vmem>>, vector<4x128xf32>
    %cst = arith.constant dense<0.000000e+00> : vector<8x128xf32>
    %4 = tpu.matmul %0, %3, %cst {dimension_numbers = #tpu.dot_dimension_numbers<[1], [0], [0], [1], [0, 0, 1, 1], [], []>} : vector<8x4xf32>, vector<4x128xf32>, vector<8x128xf32> -> vector<8x128xf32>
    %c0_7 = arith.constant 0 : index
    %c0_8 = arith.constant 0 : index
    %5 = vector.load %arg3[%c0_7, %c0_8] : memref<1x128xf32, #tpu.memory_space<vmem>>, vector<1x128xf32>
    %6 = vector.broadcast %5 : vector<1x128xf32> to vector<8x128xf32>
    %7 = arith.addf %4, %6 : vector<8x128xf32>
    %cst_9 = arith.constant 0.000000e+00 : f32
    %8 = vector.broadcast %cst_9 : f32 to vector<8x128xf32>
    %9 = arith.maximumf %7, %8 : vector<8x128xf32>
    %cst_10 = arith.constant dense<0.000000e+00> : vector<8x128xf32>
    %10 = tpu.matmul %9, %1, %cst_10 {dimension_numbers = #tpu.dot_dimension_numbers<[1], [0], [0], [1], [0, 0, 1, 1], [], []>} : vector<8x128xf32>, vector<128x128xf32>, vector<8x128xf32> -> vector<8x128xf32>
    %11 = vector.broadcast %2 : vector<1x128xf32> to vector<8x128xf32>
    %12 = arith.addf %10, %11 : vector<8x128xf32>
    %13 = math.tanh %12 : vector<8x128xf32>
    %cst_11 = arith.constant dense<0.000000e+00> : vector<8x128xf32>
    %14 = tpu.matmul %13, %1, %cst_11 {dimension_numbers = #tpu.dot_dimension_numbers<[1], [0], [0], [1], [0, 0, 1, 1], [], []>} : vector<8x128xf32>, vector<128x128xf32>, vector<8x128xf32> -> vector<8x128xf32>
    %15 = vector.broadcast %2 : vector<1x128xf32> to vector<8x128xf32>
    %16 = arith.addf %14, %15 : vector<8x128xf32>
    %cst_12 = arith.constant 0.000000e+00 : f32
    %17 = vector.broadcast %cst_12 : f32 to vector<8x128xf32>
    %18 = arith.maximumf %16, %17 : vector<8x128xf32>
    %cst_13 = arith.constant dense<0.000000e+00> : vector<8x128xf32>
    %19 = tpu.matmul %18, %1, %cst_13 {dimension_numbers = #tpu.dot_dimension_numbers<[1], [0], [0], [1], [0, 0, 1, 1], [], []>} : vector<8x128xf32>, vector<128x128xf32>, vector<8x128xf32> -> vector<8x128xf32>
    %20 = vector.broadcast %2 : vector<1x128xf32> to vector<8x128xf32>
    %21 = arith.addf %19, %20 : vector<8x128xf32>
    %cst_14 = arith.constant 0.000000e+00 : f32
    %22 = vector.broadcast %cst_14 : f32 to vector<8x128xf32>
    %23 = arith.maximumf %21, %22 : vector<8x128xf32>
    %cst_15 = arith.constant dense<0.000000e+00> : vector<8x128xf32>
    %24 = tpu.matmul %23, %1, %cst_15 {dimension_numbers = #tpu.dot_dimension_numbers<[1], [0], [0], [1], [0, 0, 1, 1], [], []>} : vector<8x128xf32>, vector<128x128xf32>, vector<8x128xf32> -> vector<8x128xf32>
    %25 = vector.broadcast %2 : vector<1x128xf32> to vector<8x128xf32>
    %26 = arith.addf %24, %25 : vector<8x128xf32>
    %27 = math.tanh %26 : vector<8x128xf32>
    %cst_16 = arith.constant dense<0.000000e+00> : vector<8x128xf32>
    %28 = tpu.matmul %27, %1, %cst_16 {dimension_numbers = #tpu.dot_dimension_numbers<[1], [0], [0], [1], [0, 0, 1, 1], [], []>} : vector<8x128xf32>, vector<128x128xf32>, vector<8x128xf32> -> vector<8x128xf32>
    %29 = vector.broadcast %2 : vector<1x128xf32> to vector<8x128xf32>
    %30 = arith.addf %28, %29 : vector<8x128xf32>
    %31 = math.tanh %30 : vector<8x128xf32>
    %c0_17 = arith.constant 0 : index
    %c0_18 = arith.constant 0 : index
    %32 = vector.load %arg6[%c0_17, %c0_18] : memref<128x2xf32, #tpu.memory_space<vmem>>, vector<128x2xf32>
    %cst_19 = arith.constant dense<0.000000e+00> : vector<8x2xf32>
    %33 = tpu.matmul %31, %32, %cst_19 {dimension_numbers = #tpu.dot_dimension_numbers<[1], [0], [0], [1], [0, 0, 1, 1], [], []>} : vector<8x128xf32>, vector<128x2xf32>, vector<8x2xf32> -> vector<8x2xf32>
    %c0_20 = arith.constant 0 : index
    %c0_21 = arith.constant 0 : index
    %34 = vector.load %arg7[%c0_20, %c0_21] : memref<1x2xf32, #tpu.memory_space<vmem>>, vector<1x2xf32>
    %35 = vector.broadcast %34 : vector<1x2xf32> to vector<8x2xf32>
    %36 = arith.addf %33, %35 : vector<8x2xf32>
    %37 = arith.negf %36 : vector<8x2xf32>
    %38 = math.exp %37 : vector<8x2xf32>
    %cst_22 = arith.constant 1.000000e+00 : f32
    %39 = vector.broadcast %cst_22 : f32 to vector<8x2xf32>
    %40 = arith.addf %39, %38 : vector<8x2xf32>
    %41 = arith.divf %39, %40 : vector<8x2xf32>
    %c0_23 = arith.constant 0 : index
    %c0_24 = arith.constant 0 : index
    %42 = vector.load %arg8[%c0_23, %c0_24] : memref<8x2xf32, #tpu.memory_space<vmem>>, vector<8x2xf32>
    tpu.vector_store %arg8[%c0_23, %c0_24], %41 {strides = array<i32>} : memref<8x2xf32, #tpu.memory_space<vmem>>, vector<8x2xf32>,
    return
  }
  func.func @transform_0(%arg0: i32) -> (i32, i32) {
    %c0_i32 = arith.constant 0 : i32
    %c0_i32_0 = arith.constant 0 : i32
    return %arg0, %c0_i32 : i32, i32
  }
  func.func @transform_1(%arg0: i32) -> (i32, i32) {
    %c0_i32 = arith.constant 0 : i32
    %c0_i32_0 = arith.constant 0 : i32
    %c0_i32_1 = arith.constant 0 : i32
    return %c0_i32, %c0_i32_0 : i32, i32
  }
  func.func @transform_2(%arg0: i32) -> (i32, i32) {
    %c0_i32 = arith.constant 0 : i32
    %c0_i32_0 = arith.constant 0 : i32
    %c0_i32_1 = arith.constant 0 : i32
    return %c0_i32, %c0_i32_0 : i32, i32
  }
  func.func @transform_3(%arg0: i32) -> (i32, i32) {
    %c0_i32 = arith.constant 0 : i32
    %c0_i32_0 = arith.constant 0 : i32
    %c0_i32_1 = arith.constant 0 : i32
    return %c0_i32, %c0_i32_0 : i32, i32
  }
  func.func @transform_4(%arg0: i32) -> (i32, i32) {
    %c0_i32 = arith.constant 0 : i32
    %c0_i32_0 = arith.constant 0 : i32
    %c0_i32_1 = arith.constant 0 : i32
    return %c0_i32, %c0_i32_0 : i32, i32
  }
  func.func @transform_5(%arg0: i32) -> (i32, i32) {
    %c0_i32 = arith.constant 0 : i32
    %c0_i32_0 = arith.constant 0 : i32
    %c0_i32_1 = arith.constant 0 : i32
    return %c0_i32, %c0_i32_0 : i32, i32
  }
  func.func @transform_6(%arg0: i32) -> (i32, i32) {
    %c0_i32 = arith.constant 0 : i32
    %c0_i32_0 = arith.constant 0 : i32
    %c0_i32_1 = arith.constant 0 : i32
    return %c0_i32, %c0_i32_0 : i32, i32
  }
  func.func @transform_7(%arg0: i32) -> (i32, i32) {
    %c0_i32 = arith.constant 0 : i32
    %c0_i32_0 = arith.constant 0 : i32
    return %arg0, %c0_i32 : i32, i32
  }
}

</mosaic_0001>

<llo_original>
// kernel: tpu_custom_call.1
$region0: #{tpu_custom_call.1}
  #allocation0 [shape = 'u32[]', space=smem, size = 0x4, offset = 0x4, fixed_abs, tag = 'smem constant byte address 0x4 - core index']
  #allocation1 [shape = 'u32[72,128]{1,0:T(1,128)}', space=vmem, size = 0x9000, scoped, tag = 'internal scratch']
  %s0 = inlined_call_operand.vmem [shape: f32[8,4], index: 0, kind: input, shape index: {}]
  %s1 = inlined_call_operand.vmem [shape: f32[4,128], index: 1, kind: input, shape index: {}]
  %s2 = inlined_call_operand.vmem [shape: f32[1,128], index: 2, kind: input, shape index: {}]
  %s3 = inlined_call_operand.vmem [shape: f32[128,128], index: 3, kind: input, shape index: {}]
  %s4 = inlined_call_operand.vmem [shape: f32[1,128], index: 4, kind: input, shape index: {}]
  %s5 = inlined_call_operand.vmem [shape: f32[128,2], index: 5, kind: input, shape index: {}]
  %s6 = inlined_call_operand.vmem [shape: f32[1,2], index: 6, kind: input, shape index: {}]
  %s7 = inlined_call_operand.vmem [shape: f32[8,2], index: 7, kind: output, shape index: {}]
  %s8 = sld [smem:[#allocation0]]
  $region38: #{tpu_custom_call.1} parent=0
    _
  %s10 = ssub.s32 1, %s8
  %s11 = scalar_select 0, %s10, %s8
  // Predicated region
  $region2: #{tpu_custom_call.1} parent=0 // pred_check
    _
  $region3: #{tpu_custom_call.1} parent=0 // pred_check_branch
    %13 = sbr.rel (0) target = $region5
  $region4: #{tpu_custom_call.1} parent=0 // pred_region
    _
  $region5: #{tpu_custom_call.1} parent=0 // pred_fallthru
    _
  // Predicated region
  $region6: #{tpu_custom_call.1} parent=0 // pred_check
    _
  $region7: #{tpu_custom_call.1} parent=0 // pred_check_branch
    %15 = sbr.rel (0) target = $region9
  $region8: #{tpu_custom_call.1} parent=0 // pred_region
    _
  $region9: #{tpu_custom_call.1} parent=0 // pred_fallthru
    _
  // Predicated region
  $region10: #{tpu_custom_call.1} parent=0 // pred_check
    _
  $region11: #{tpu_custom_call.1} parent=0 // pred_check_branch
    %17 = sbr.rel (0) target = $region13
  $region12: #{tpu_custom_call.1} parent=0 // pred_region
    _
  $region13: #{tpu_custom_call.1} parent=0 // pred_fallthru
    _
  // Predicated region
  $region14: #{tpu_custom_call.1} parent=0 // pred_check
    _
  $region15: #{tpu_custom_call.1} parent=0 // pred_check_branch
    %19 = sbr.rel (0) target = $region17
  $region16: #{tpu_custom_call.1} parent=0 // pred_region
    _
  $region17: #{tpu_custom_call.1} parent=0 // pred_fallthru
    _
  // Predicated region
  $region18: #{tpu_custom_call.1} parent=0 // pred_check
    _
  $region19: #{tpu_custom_call.1} parent=0 // pred_check_branch
    %21 = sbr.rel (0) target = $region21
  $region20: #{tpu_custom_call.1} parent=0 // pred_region
    _
  $region21: #{tpu_custom_call.1} parent=0 // pred_fallthru
    _
  // Predicated region
  $region22: #{tpu_custom_call.1} parent=0 // pred_check
    _
  $region23: #{tpu_custom_call.1} parent=0 // pred_check_branch
    %23 = sbr.rel (0) target = $region25
  $region24: #{tpu_custom_call.1} parent=0 // pred_region
    _
  $region25: #{tpu_custom_call.1} parent=0 // pred_fallthru
    _
  // Predicated region
  $region26: #{tpu_custom_call.1} parent=0 // pred_check
    _
  $region27: #{tpu_custom_call.1} parent=0 // pred_check_branch
    %25 = sbr.rel (0) target = $region29
  $region28: #{tpu_custom_call.1} parent=0 // pred_region
    _
  $region29: #{tpu_custom_call.1} parent=0 // pred_fallthru
    _
  %v26 = vld [vmem:[%s0] sm:$0xff]
  %v27 = vld [vmem:[%s3] sm:$0xff]
  %v28 = vld [vmem:[%s3 + $0x8] sm:$0xff]
  %v29 = vld [vmem:[%s3 + $0x10] sm:$0xff]
  %v30 = vld [vmem:[%s3 + $0x18] sm:$0xff]
  %v31 = vld [vmem:[%s3 + $0x20] sm:$0xff]
  %v32 = vld [vmem:[%s3 + $0x28] sm:$0xff]
  %v33 = vld [vmem:[%s3 + $0x30] sm:$0xff]
  %v34 = vld [vmem:[%s3 + $0x38] sm:$0xff]
  %v35 = vld [vmem:[%s3 + $0x40] sm:$0xff]
  %v36 = vld [vmem:[%s3 + $0x48] sm:$0xff]
  %v37 = vld [vmem:[%s3 + $0x50] sm:$0xff]
  %v38 = vld [vmem:[%s3 + $0x58] sm:$0xff]
  %v39 = vld [vmem:[%s3 + $0x60] sm:$0xff]
  %v40 = vld [vmem:[%s3 + $0x68] sm:$0xff]
  %v41 = vld [vmem:[%s3 + $0x70] sm:$0xff]
  %v42 = vld [vmem:[%s3 + $0x78] sm:$0xff]
  %v43 = vld [vmem:[%s4] sm:$0x1]
  %v44 = vld [vmem:[%s1] sm:$0xf]
  %v45 = vld [vmem:[%s2] sm:$0x1]
  %v47 = vperm.slane %v45, 0
  %vm49 = vcmask 31744
  %v51 = vsel %vm49, %v26, 0
  %vm53 = vcmask 1043456
  %v55 = vsel %vm53, %v44, 0
  %57 = vmatpush.msra.mxu0 0.0
  %58 = vmatpush.msra.mxu0 0.0
  %59 = vmatpush.msra.mxu0 0.0
  %60 = vmatpush.msra.mxu0 0.0
  %61 = vmatpush.msra.mxu0 0.0
  %62 = vmatpush.msra.mxu0 0.0
  %63 = vmatpush.msra.mxu0 0.0
  %64 = vmatpush.msra.mxu0 0.0
  %65 = vmatpush.msra.mxu0 0.0
  %66 = vmatpush.msra.mxu0 0.0
  %67 = vmatpush.msra.mxu0 0.0
  %68 = vmatpush.msra.mxu0 0.0
  %69 = vmatpush.msra.mxu0 0.0
  %70 = vmatpush.msra.mxu0 0.0
  %71 = vmatpush.msra.mxu0 0.0
  %72 = vmatpush.msra.mxu0 %v55
  %73 = vmatmul.f32.gmra.mxu0 %v51
  %v74 = vpop.f32.mrf.mxu0
  %v75 = vadd.f32 %v47, %v74
  %76 = vdwg.mxu0
  %v77 = vmax.f32 %v75, 0.0
  %v79 = vperm.slane %v43, 0
  %81 = vmatpush.msra.mxu0 %v42
  %82 = vmatpush.msra.mxu0 %v41
  %83 = vmatpush.msra.mxu0 %v40
  %84 = vmatpush.msra.mxu0 %v39
  %85 = vmatpush.msra.mxu0 %v38
  %86 = vmatpush.msra.mxu0 %v37
  %87 = vmatpush.msra.mxu0 %v36
  %88 = vmatpush.msra.mxu0 %v35
  %89 = vmatpush.msra.mxu0 %v34
  %90 = vmatpush.msra.mxu0 %v33
  %91 = vmatpush.msra.mxu0 %v32
  %92 = vmatpush.msra.mxu0 %v31
  %93 = vmatpush.msra.mxu0 %v30
  %94 = vmatpush.msra.mxu0 %v29
  %95 = vmatpush.msra.mxu0 %v28
  %96 = vmatpush.msra.mxu0 %v27
  %97 = vmatmul.f32.gmra.mxu0 %v77
  %v98 = vpop.f32.mrf.mxu0
  %v99 = vadd.f32 %v79, %v98
  %100 = vdwg.mxu0
  %v101 = vtanh.pop %v99
  %102 = vmatpush.msra.mxu0 %v42
  %103 = vmatpush.msra.mxu0 %v41
  %104 = vmatpush.msra.mxu0 %v40
  %105 = vmatpush.msra.mxu0 %v39
  %106 = vmatpush.msra.mxu0 %v38
  %107 = vmatpush.msra.mxu0 %v37
  %108 = vmatpush.msra.mxu0 %v36
  %109 = vmatpush.msra.mxu0 %v35
  %110 = vmatpush.msra.mxu0 %v34
  %111 = vmatpush.msra.mxu0 %v33
  %112 = vmatpush.msra.mxu0 %v32
  %113 = vmatpush.msra.mxu0 %v31
  %114 = vmatpush.msra.mxu0 %v30
  %115 = vmatpush.msra.mxu0 %v29
  %116 = vmatpush.msra.mxu0 %v28
  %117 = vmatpush.msra.mxu0 %v27
  %118 = vmatmul.f32.gmra.mxu0 %v101
  %v119 = vpop.f32.mrf.mxu0
  %v120 = vadd.f32 %v79, %v119
  %121 = vdwg.mxu0
  %v122 = vmax.f32 %v120, 0.0
  %123 = vmatpush.msra.mxu0 %v42
  %124 = vmatpush.msra.mxu0 %v41
  %125 = vmatpush.msra.mxu0 %v40
  %126 = vmatpush.msra.mxu0 %v39
  %127 = vmatpush.msra.mxu0 %v38
  %128 = vmatpush.msra.mxu0 %v37
  %129 = vmatpush.msra.mxu0 %v36
  %130 = vmatpush.msra.mxu0 %v35
  %131 = vmatpush.msra.mxu0 %v34
  %132 = vmatpush.msra.mxu0 %v33
  %133 = vmatpush.msra.mxu0 %v32
  %134 = vmatpush.msra.mxu0 %v31
  %135 = vmatpush.msra.mxu0 %v30
  %136 = vmatpush.msra.mxu0 %v29
  %137 = vmatpush.msra.mxu0 %v28
  %138 = vmatpush.msra.mxu0 %v27
  %139 = vmatmul.f32.gmra.mxu0 %v122
  %v140 = vpop.f32.mrf.mxu0
  %v141 = vadd.f32 %v79, %v140
  %142 = vdwg.mxu0
  %v143 = vmax.f32 %v141, 0.0
  %144 = vmatpush.msra.mxu0 %v42
  %145 = vmatpush.msra.mxu0 %v41
  %146 = vmatpush.msra.mxu0 %v40
  %147 = vmatpush.msra.mxu0 %v39
  %148 = vmatpush.msra.mxu0 %v38
  %149 = vmatpush.msra.mxu0 %v37
  %150 = vmatpush.msra.mxu0 %v36
  %151 = vmatpush.msra.mxu0 %v35
  %152 = vmatpush.msra.mxu0 %v34
  %153 = vmatpush.msra.mxu0 %v33
  %154 = vmatpush.msra.mxu0 %v32
  %155 = vmatpush.msra.mxu0 %v31
  %156 = vmatpush.msra.mxu0 %v30
  %157 = vmatpush.msra.mxu0 %v29
  %158 = vmatpush.msra.mxu0 %v28
  %159 = vmatpush.msra.mxu0 %v27
  %160 = vmatmul.f32.gmra.mxu0 %v143
  %v161 = vpop.f32.mrf.mxu0
  %v162 = vadd.f32 %v79, %v161
  %163 = vdwg.mxu0
  %v164 = vtanh.pop %v162
  %165 = vmatpush.msra.mxu0 %v42
  %166 = vmatpush.msra.mxu0 %v41
  %167 = vmatpush.msra.mxu0 %v40
  %168 = vmatpush.msra.mxu0 %v39
  %169 = vmatpush.msra.mxu0 %v38
  %170 = vmatpush.msra.mxu0 %v37
  %171 = vmatpush.msra.mxu0 %v36
  %172 = vmatpush.msra.mxu0 %v35
  %173 = vmatpush.msra.mxu0 %v34
  %174 = vmatpush.msra.mxu0 %v33
  %175 = vmatpush.msra.mxu0 %v32
  %176 = vmatpush.msra.mxu0 %v31
  %177 = vmatpush.msra.mxu0 %v30
  %178 = vmatpush.msra.mxu0 %v29
  %179 = vmatpush.msra.mxu0 %v28
  %180 = vmatpush.msra.mxu0 %v27
  %181 = vmatmul.f32.gmra.mxu0 %v164
  %v182 = vpop.f32.mrf.mxu0
  %v183 = vadd.f32 %v79, %v182
  %184 = vdwg.mxu0
  %v185 = vtanh.pop %v183
  %v186 = vld [vmem:[%s5] sm:$0xff]
  %v187 = vld [vmem:[%s5 + $0x8] sm:$0xff]
  %v188 = vld [vmem:[%s5 + $0x10] sm:$0xff]
  %v189 = vld [vmem:[%s5 + $0x18] sm:$0xff]
  %v190 = vld [vmem:[%s5 + $0x20] sm:$0xff]
  %v191 = vld [vmem:[%s5 + $0x28] sm:$0xff]
  %v192 = vld [vmem:[%s5 + $0x30] sm:$0xff]
  %v193 = vld [vmem:[%s5 + $0x38] sm:$0xff]
  %v194 = vld [vmem:[%s5 + $0x40] sm:$0xff]
  %v195 = vld [vmem:[%s5 + $0x48] sm:$0xff]
  %v196 = vld [vmem:[%s5 + $0x50] sm:$0xff]
  %v197 = vld [vmem:[%s5 + $0x58] sm:$0xff]
  %v198 = vld [vmem:[%s5 + $0x60] sm:$0xff]
  %v199 = vld [vmem:[%s5 + $0x68] sm:$0xff]
  %v200 = vld [vmem:[%s5 + $0x70] sm:$0xff]
  %v201 = vld [vmem:[%s5 + $0x78] sm:$0xff]
  %v202 = vld [vmem:[%s6] sm:$0x1]
  %v204 = vperm.slane %v202, 0
  %206 = vmatpush.msra.mxu0 %v201
  %207 = vmatpush.msra.mxu0 %v200
  %208 = vmatpush.msra.mxu0 %v199
  %209 = vmatpush.msra.mxu0 %v198
  %210 = vmatpush.msra.mxu0 %v197
  %211 = vmatpush.msra.mxu0 %v196
  %212 = vmatpush.msra.mxu0 %v195
  %213 = vmatpush.msra.mxu0 %v194
  %214 = vmatpush.msra.mxu0 %v193
  %215 = vmatpush.msra.mxu0 %v192
  %216 = vmatpush.msra.mxu0 %v191
  %217 = vmatpush.msra.mxu0 %v190
  %218 = vmatpush.msra.mxu0 %v189
  %219 = vmatpush.msra.mxu0 %v188
  %220 = vmatpush.msra.mxu0 %v187
  %221 = vmatpush.msra.mxu0 %v186
  %222 = vmatmul.f32.gmra.mxu0 %v185
  %v223 = vpop.f32.mrf.mxu0
  %v224 = vadd.f32 %v204, %v223
  %225 = vdwg.mxu0
  %v226 = vxor.u32 %v224, 2147483648
  %v227 = vmul.f32 %v226, 1.442695
  %v228 = vpow.pop %v227
  %v229 = vadd.f32 %v228, 1.0
  %v230 = vrcp.pop %v229
  %v231 = vmul.f32 %v229, %v230
  %v232 = vsub.f32 1.0, %v231
  %v233 = vmul.f32 %v230, %v232
  %v234 = vadd.f32 %v230, %v233
  %vm235 = vweird.f32 %v229
  %vm236 = vweird.f32 %v230
  %vm237 = vmor %vm235, %vm236
  %v238 = vsel %vm237, %v230, %v234
  %v239 = vand.u32 2147483647, %v229
  %vm240 = vcmp.eq.f32.partialorder %v239, 8.507059e+37
  %v241 = vand.u32 %v229, 2147483648
  %v242 = vor.u32 1.1754944e-38, %v241
  %v243 = vsel %vm240, %v242, %v238
  %v244 = vmul.f32 1.0, %v243
  %vm245 = vcmask 15360
  %246 = vst.msk [vmem:[%s7] sm:$0xff] %vm245, %v244
  // Predicated region
  $region30: #{tpu_custom_call.1} parent=0 // pred_check
    _
  $region31: #{tpu_custom_call.1} parent=0 // pred_check_branch
    %248 = sbr.rel (0) target = $region33
  $region32: #{tpu_custom_call.1} parent=0 // pred_region
    _
  $region33: #{tpu_custom_call.1} parent=0 // pred_fallthru
    _
  // Predicated region
  $region34: #{tpu_custom_call.1} parent=0 // pred_check
    _
  $region35: #{tpu_custom_call.1} parent=0 // pred_check_branch
    %250 = sbr.rel (0) target = $region37
  $region36: #{tpu_custom_call.1} parent=0 // pred_region
    _
  $region37: #{tpu_custom_call.1} parent=0 // pred_fallthru
    _

</llo_original>
